<compile_context>
chip_gen: v7x
topology: tpu7x:2x2x1
jax: 0.10.0
libtpu: 0.0.40
codegen_flags: <defaults>
</compile_context>

<pallas_src>
import jax
import jax.numpy as jnp
from jax.experimental import pallas as pl
from jax.experimental.pallas import tpu as pltpu


def _round_up(x, m):
    return ((x + m - 1) // m) * m


def _duq_kernel(x_ref, wt_ref, emb_ref, s_ref, out_ref):
    # [TB, F] (bf16) @ [F, CEp] (bf16) -> [TB, CEp] f32 on the MXU.
    z = jnp.dot(x_ref[...], wt_ref[...], preferred_element_type=jnp.float32)
    # Squared distance against the flattened centroids (VPU, f32).
    d = z - emb_ref[...]                               # [TB, CEp]
    d2 = (d * d).astype(jnp.bfloat16)                  # [TB, CEp] bf16 for MXU
    # Per-class mean + 1/(N*2*sigma^2) scale fused into one bf16 block-diagonal
    # reduction matmul (MXU), f32 accumulation.
    msq = jnp.dot(d2, s_ref[...], preferred_element_type=jnp.float32)  # [TB, Cp]
    # Epilogue: one EUP exp + one lane-dense bf16 store of the whole tile.
    out_ref[...] = jnp.exp(-msq).astype(out_ref.dtype)


def prepare_duq_params(W, m, N, length_scale):
    """One-time (model-load) re-layout of the DUQ parameters for the kernel.

    W: [E, C, F], m: [E, C], N: [C]  ->  (wt, emb, s) laid out for the kernel
    with lane-padded class dimensions and the per-class scale folded into s.
    """
    E, C, F = W.shape
    CE = C * E
    CEp = _round_up(CE, 128)           # padded projection width (lane dim of z)
    Cp = _round_up(C, 128)             # padded class width (lane-dense output)
    sigma = float(length_scale)

    # Wt[f, c*E + e] = W[e, c, f]  ->  z_flat[b, c*E + e] == z[b, e, c]
    wt = jnp.transpose(W, (1, 0, 2)).reshape(CE, F).T            # [F, CE]
    wt = jnp.pad(wt, ((0, 0), (0, CEp - CE))).astype(jnp.bfloat16)

    # Flattened centroids in the same column order (kept f32).
    emb = (m / N[None, :]).T.reshape(1, CE)                      # [1, CE]
    emb = jnp.pad(emb, ((0, 0), (0, CEp - CE))).astype(jnp.float32)

    # Block-diagonal reduction matrix with the scale folded in:
    #   S'[c*E + e, c] = (1/E) * 1/(N[c] * 2 * sigma^2), zeros elsewhere.
    # Stored in bf16 for the fast MXU path (1/E is exact for power-of-2 E;
    # the inv_scale fold is a documented bf16 quantization).
    inv_scale = 1.0 / (N.astype(jnp.float32) * 2.0 * sigma * sigma)  # [C]
    scale_col = jnp.pad(inv_scale / E, (0, Cp - C))                  # [Cp]
    row = jnp.arange(CEp)
    col = jnp.arange(Cp)
    blockdiag = (
        ((row[:, None] // E) == col[None, :])
        & (row[:, None] < CE)
        & (col[None, :] < C)
    )
    s = jnp.where(blockdiag, scale_col[None, :], 0.0).astype(jnp.bfloat16)  # [CEp, Cp]

    return wt, emb, s


def _choose_batch_tiling(B, block_b):
    """Balanced batch tiles, multiple of 16, >=2 grid steps when B >= 32."""
    B16 = _round_up(max(B, 1), 16)
    if B16 >= 32:
        # At least two grid steps so the "parallel" batch axis can be sharded
        # across v7x's two TensorCores; more when B exceeds block_b.
        n_tiles = max(2, pl.cdiv(B16, block_b))
    else:
        n_tiles = 1
    tb = _round_up(pl.cdiv(B16, n_tiles), 16)   # balanced -> no ~2x dead rows
    return n_tiles, tb


def electra_duq_forward(features, params, num_classes, *, block_b=1024):
    """features: [B, S, F]; params from prepare_duq_params()."""
    wt, emb, s = params
    B = features.shape[0]
    F = features.shape[-1]
    CEp = wt.shape[1]
    Cp = s.shape[1]

    # CLS token, bf16 for the MXU (accumulation stays f32 inside the kernel).
    x = features[:, 0, :].astype(jnp.bfloat16)                   # [B, F]

    n_tiles, TB = _choose_batch_tiling(B, block_b)
    Bp = n_tiles * TB
    if Bp != B:
        x = jnp.pad(x, ((0, Bp - B), (0, 0)))

    out = pl.pallas_call(
        _duq_kernel,
        out_shape=jax.ShapeDtypeStruct((Bp, Cp), jnp.bfloat16),
        grid_spec=pltpu.PrefetchScalarGridSpec(
            num_scalar_prefetch=0,
            grid=(n_tiles,),
            in_specs=[
                pl.BlockSpec((TB, F), lambda i: (i, 0)),      # x: streamed per tile
                pl.BlockSpec((F, CEp), lambda i: (0, 0)),     # Wt: resident
                pl.BlockSpec((1, CEp), lambda i: (0, 0)),     # centroids: resident
                pl.BlockSpec((CEp, Cp), lambda i: (0, 0)),    # fused reduction+scale: resident
            ],
            out_specs=pl.BlockSpec((TB, Cp), lambda i: (i, 0)),
        ),
        compiler_params=pltpu.CompilerParams(
            dimension_semantics=("parallel",),
        ),
    )(x, wt, emb, s)

    # Padded batch rows / class lanes are dropped here; cast back to f32 for API parity.
    return out[:B, :num_classes].astype(jnp.float32)


if __name__ == "__main__":
    # Small shapes consistent with the module:
    #   feat_size (classifier.dense.in_features)       F = 32
    #   num_classes (classifier.out_proj.out_features) C = 4
    #   embedding_size                                  E = 32
    B, S, F = 8, 8, 32
    E, C = 32, 4
    batch_size = 8            # used only to initialize the N buffer
    length_scale = 0.5        # sigma (not learnable)
    gamma = 0.999             # unused in forward
    l_gradient_penalty = 0.0  # unused in forward

    key = jax.random.PRNGKey(0)
    k_feat, k_w, k_m = jax.random.split(key, 3)

    features = jax.random.normal(k_feat, (B, S, F), dtype=jnp.float32)
    # W ~ Normal(0, 0.05), shape [embedding_size, num_classes, feat_size]
    W = 0.05 * jax.random.normal(k_w, (E, C, F), dtype=jnp.float32)
    # N buffer: ones(C) * batch_size / C
    N = jnp.ones((C,), jnp.float32) * (batch_size / C)
    # m buffer: Normal(0, 1) of shape [E, C], then m = m * N[None, :]
    m = jax.random.normal(k_m, (E, C), dtype=jnp.float32) * N[None, :]

    params = prepare_duq_params(W, m, N, length_scale)   # one-time layout prep
    y = electra_duq_forward(features, params, C)
    y = jax.block_until_ready(y)

    # Pure-JAX reference (mirrors the PyTorch forward exactly, f32).
    x_ref = features[:, 0, :]
    z_ref = jnp.einsum("ij,mnj->imn", x_ref, W)          # [B, E, C]
    emb_ref = m / N[None, :]                             # [E, C]
    diff = z_ref - emb_ref[None]                         # [B, E, C]
    msq = jnp.mean(diff ** 2, axis=1)                    # [B, C]
    y_ref = jnp.exp(-msq / (N * 2.0 * length_scale ** 2))

    assert y.shape == (B, C)
    assert jnp.allclose(y, y_ref, rtol=2e-2, atol=1e-3), (y, y_ref)
    print("KERNEL_OK")
</pallas_src>

<mosaic_0001>
module attributes {stable_mosaic.version = 11 : i64} {
  func.func @_duq_kernel(%arg0: i32, %arg1: memref<16x32xbf16, #tpu.memory_space<vmem>>, %arg2: memref<32x128xbf16, #tpu.memory_space<vmem>>, %arg3: memref<1x128xf32, #tpu.memory_space<vmem>>, %arg4: memref<128x128xbf16, #tpu.memory_space<vmem>>, %arg5: memref<16x128xbf16, #tpu.memory_space<vmem>>) attributes {dimension_semantics = [#tpu.dimension_semantics<parallel>], iteration_bounds = array<i64: 1>, scalar_prefetch = 0 : i64, scratch_operands = 0 : i64, tpu.core_type = #tpu.core_type<tc>, window_params = [{transform_indices = @transform_0, window_bounds = array<i64: 16, 32>}, {pipeline_mode = #tpu.pipeline_mode<synchronous>, transform_indices = @transform_1, window_bounds = array<i64: 32, 128>}, {pipeline_mode = #tpu.pipeline_mode<synchronous>, transform_indices = @transform_2, window_bounds = array<i64: 1, 128>}, {pipeline_mode = #tpu.pipeline_mode<synchronous>, transform_indices = @transform_3, window_bounds = array<i64: 128, 128>}, {transform_indices = @transform_4, window_bounds = array<i64: 16, 128>}]} {
    %c0 = arith.constant 0 : index
    %c0_0 = arith.constant 0 : index
    %0 = vector.load %arg1[%c0, %c0_0] : memref<16x32xbf16, #tpu.memory_space<vmem>>, vector<16x32xbf16>
    %c0_1 = arith.constant 0 : index
    %c0_2 = arith.constant 0 : index
    %1 = vector.load %arg2[%c0_1, %c0_2] : memref<32x128xbf16, #tpu.memory_space<vmem>>, vector<32x128xbf16>
    %cst = arith.constant dense<0.000000e+00> : vector<16x128xf32>
    %2 = tpu.matmul %0, %1, %cst {dimension_numbers = #tpu.dot_dimension_numbers<[1], [0], [0], [1], [0, 0, 1, 1], [], []>} : vector<16x32xbf16>, vector<32x128xbf16>, vector<16x128xf32> -> vector<16x128xf32>
    %c0_3 = arith.constant 0 : index
    %c0_4 = arith.constant 0 : index
    %3 = vector.load %arg3[%c0_3, %c0_4] : memref<1x128xf32, #tpu.memory_space<vmem>>, vector<1x128xf32>
    %4 = vector.broadcast %3 : vector<1x128xf32> to vector<16x128xf32>
    %5 = arith.subf %2, %4 : vector<16x128xf32>
    %6 = arith.mulf %5, %5 : vector<16x128xf32>
    %7 = arith.truncf %6 : vector<16x128xf32> to vector<16x128xbf16>
    %c0_5 = arith.constant 0 : index
    %c0_6 = arith.constant 0 : index
    %8 = vector.load %arg4[%c0_5, %c0_6] : memref<128x128xbf16, #tpu.memory_space<vmem>>, vector<128x128xbf16>
    %cst_7 = arith.constant dense<0.000000e+00> : vector<16x128xf32>
    %9 = tpu.matmul %7, %8, %cst_7 {dimension_numbers = #tpu.dot_dimension_numbers<[1], [0], [0], [1], [0, 0, 1, 1], [], []>} : vector<16x128xbf16>, vector<128x128xbf16>, vector<16x128xf32> -> vector<16x128xf32>
    %cst_8 = arith.constant 0.000000e+00 : f32
    %10 = vector.broadcast %cst_8 : f32 to vector<16x128xf32>
    %11 = arith.subf %10, %9 : vector<16x128xf32>
    %12 = math.exp %11 : vector<16x128xf32>
    %13 = arith.truncf %12 : vector<16x128xf32> to vector<16x128xbf16>
    %c0_9 = arith.constant 0 : index
    %c0_10 = arith.constant 0 : index
    %14 = vector.load %arg5[%c0_9, %c0_10] : memref<16x128xbf16, #tpu.memory_space<vmem>>, vector<16x128xbf16>
    tpu.vector_store %arg5[%c0_9, %c0_10], %13 {strides = array<i32>} : memref<16x128xbf16, #tpu.memory_space<vmem>>, vector<16x128xbf16>,
    return
  }
  func.func @transform_0(%arg0: i32) -> (i32, i32) {
    %c0_i32 = arith.constant 0 : i32
    %c0_i32_0 = arith.constant 0 : i32
    return %arg0, %c0_i32 : i32, i32
  }
  func.func @transform_1(%arg0: i32) -> (i32, i32) {
    %c0_i32 = arith.constant 0 : i32
    %c0_i32_0 = arith.constant 0 : i32
    %c0_i32_1 = arith.constant 0 : i32
    return %c0_i32, %c0_i32_0 : i32, i32
  }
  func.func @transform_2(%arg0: i32) -> (i32, i32) {
    %c0_i32 = arith.constant 0 : i32
    %c0_i32_0 = arith.constant 0 : i32
    %c0_i32_1 = arith.constant 0 : i32
    return %c0_i32, %c0_i32_0 : i32, i32
  }
  func.func @transform_3(%arg0: i32) -> (i32, i32) {
    %c0_i32 = arith.constant 0 : i32
    %c0_i32_0 = arith.constant 0 : i32
    %c0_i32_1 = arith.constant 0 : i32
    return %c0_i32, %c0_i32_0 : i32, i32
  }
  func.func @transform_4(%arg0: i32) -> (i32, i32) {
    %c0_i32 = arith.constant 0 : i32
    %c0_i32_0 = arith.constant 0 : i32
    return %arg0, %c0_i32 : i32, i32
  }
}

</mosaic_0001>

<llo_original>
// kernel: tpu_custom_call.1
$region0: #{tpu_custom_call.1}
  #allocation0 [shape = 'u32[]', space=smem, size = 0x4, offset = 0x4, fixed_abs, tag = 'smem constant byte address 0x4 - core index']
  #allocation1 [shape = 'u32[144,128]{1,0:T(1,128)}', space=vmem, size = 0x12000, scoped, tag = 'internal scratch']
  %s0 = inlined_call_operand.hbm [shape: bf16[16,32], index: 0, kind: input, shape index: {}]
  %s1 = inlined_call_operand.hbm [shape: bf16[32,128], index: 1, kind: input, shape index: {}]
  %s2 = inlined_call_operand.vmem [shape: f32[1,128], index: 2, kind: input, shape index: {}]
  %s3 = inlined_call_operand.hbm [shape: bf16[128,128], index: 3, kind: input, shape index: {}]
  %s4 = inlined_call_operand.hbm [shape: bf16[16,128], index: 4, kind: output, shape index: {}]
  %s5 = sld [smem:[#allocation0]]
  $region38: #{tpu_custom_call.1} parent=0
    _
  %s7 = ssub.s32 1, %s5
  %s8 = scalar_select 0, %s7, %s5
  $region1: #{tpu_custom_call.1} parent=0
    #allocation2 [shape = 'u8[4096]{0}', space=vmem, size = 0x1000, scoped, tag = 'input window, operand 0, single buffered']
    #allocation3 [shape = 's32[1]{0}', space=sflag, size = 0x4, scoped, tag = 'scoped memory for tpu_custom_call.1']
    #allocation4 [shape = 's32[1]{0}', space=sflag, size = 0x4, scoped, tag = 'scoped memory for tpu_custom_call.1']
    #allocation5 [shape = 'u8[8192]{0}', space=vmem, size = 0x2000, scoped, tag = 'input window, operand 1, single buffered']
    #allocation6 [shape = 's32[1]{0}', space=sflag, size = 0x4, scoped, tag = 'scoped memory for tpu_custom_call.1']
    #allocation7 [shape = 'u8[32768]{0}', space=vmem, size = 0x8000, scoped, tag = 'input window, operand 3, single buffered']
    #allocation8 [shape = 'u8[4096]{0}', space=vmem, size = 0x1000, scoped, tag = 'output window, operand 0, single buffered']
    %9 = vsyncpa [#allocation3], 0
    %10 = vsyncpa [#allocation6], 0
    %11 = vsyncpa [#allocation4], 0
    // Predicated region
    $region2: #{tpu_custom_call.1} parent=1 // pred_check
      _
    $region3: #{tpu_custom_call.1} parent=1 // pred_check_branch
      %13 = sbr.rel (0) target = $region5
    $region4: #{tpu_custom_call.1} parent=1 // pred_region
      %s15 = ssub.s32 128, 128
      %16 = vsyncadd [#allocation3], %s15
      %s17 = sshll.u32 [#allocation2], 4
      %s18 = int_to_ptr.vmem [resolvable:$true] %s17
      %23 = dma.hbm_to_vmem [thread:$0]  %s0, 128, %s18, [#allocation3], 64, 64, 4
    $region5: #{tpu_custom_call.1} parent=1 // pred_fallthru
      _
    // Predicated region
    $region6: #{tpu_custom_call.1} parent=1 // pred_check
      _
    $region7: #{tpu_custom_call.1} parent=1 // pred_check_branch
      %25 = sbr.rel (0) target = $region9
    $region8: #{tpu_custom_call.1} parent=1 // pred_region
      %s27 = ssub.s32 256, 256
      %28 = vsyncadd [#allocation6], %s27
      %s29 = sshll.u32 [#allocation5], 4
      %s30 = int_to_ptr.vmem [resolvable:$true] %s29
      %35 = dma.hbm_to_vmem [thread:$0]  %s1, 256, %s30, [#allocation6], 64, 64, 4
    $region9: #{tpu_custom_call.1} parent=1 // pred_fallthru
      _
    // Predicated region
    $region10: #{tpu_custom_call.1} parent=1 // pred_check
      _
    $region11: #{tpu_custom_call.1} parent=1 // pred_check_branch
      %37 = sbr.rel (0) target = $region13
    $region12: #{tpu_custom_call.1} parent=1 // pred_region
      _
    $region13: #{tpu_custom_call.1} parent=1 // pred_fallthru
      _
    // Predicated region
    $region14: #{tpu_custom_call.1} parent=1 // pred_check
      _
    $region15: #{tpu_custom_call.1} parent=1 // pred_check_branch
      %39 = sbr.rel (0) target = $region17
    $region16: #{tpu_custom_call.1} parent=1 // pred_region
      %s41 = ssub.s32 1024, 1024
      %42 = vsyncadd [#allocation6], %s41
      %s43 = sshll.u32 [#allocation7], 4
      %s44 = int_to_ptr.vmem [resolvable:$true] %s43
      %49 = dma.hbm_to_vmem [thread:$0]  %s3, 1024, %s44, [#allocation6], 64, 64, 4
    $region17: #{tpu_custom_call.1} parent=1 // pred_fallthru
      _
    // Predicated region
    $region18: #{tpu_custom_call.1} parent=1 // pred_check
      _
    $region19: #{tpu_custom_call.1} parent=1 // pred_check_branch
      %51 = sbr.rel (0) target = $region21
    $region20: #{tpu_custom_call.1} parent=1 // pred_region
      %52 = dma.done [#allocation3], 128
    $region21: #{tpu_custom_call.1} parent=1 // pred_fallthru
      _
    // Predicated region
    $region22: #{tpu_custom_call.1} parent=1 // pred_check
      _
    $region23: #{tpu_custom_call.1} parent=1 // pred_check_branch
      %54 = sbr.rel (0) target = $region25
    $region24: #{tpu_custom_call.1} parent=1 // pred_region
      %55 = dma.done [#allocation6], 256
    $region25: #{tpu_custom_call.1} parent=1 // pred_fallthru
      _
    // Predicated region
    $region26: #{tpu_custom_call.1} parent=1 // pred_check
      _
    $region27: #{tpu_custom_call.1} parent=1 // pred_check_branch
      %57 = sbr.rel (0) target = $region29
    $region28: #{tpu_custom_call.1} parent=1 // pred_region
      %58 = dma.done [#allocation6], 1024
    $region29: #{tpu_custom_call.1} parent=1 // pred_fallthru
      _
    %v60 = vld [vmem:[#allocation2] sm:$0xf]
    %v61 = vld [vmem:[#allocation2 + $0x4] sm:$0xf]
    %v62 = vld [vmem:[#allocation5] sm:$0xf]
    %v63 = vld [vmem:[#allocation5 + $0x4] sm:$0xf]
    %v64 = vld [vmem:[#allocation5 + $0x8] sm:$0xf]
    %v65 = vld [vmem:[#allocation5 + $0xc] sm:$0xf]
    %v68 = vunpack.c.l.b16 %v60
    %v69 = vunpack.c.l.b16 %v61
    %v70 = vpack.c.b16 %v69, %v68
    %v75 = vunpack.c.l.b16 %v62
    %v76 = vunpack.c.l.b16 %v63
    %v77 = vunpack.c.l.b16 %v64
    %v78 = vunpack.c.l.b16 %v65
    %v79 = vpack.c.b16 %v76, %v75
    %v80 = vpack.c.b16 %v78, %v77
    %vm83 = vcmask 261120
    %v85 = vsel %vm83, %v70, 0
    %87 = vmatprep.subr.bf16.mxu0 0
    %88 = vmatpush1.bf16.msra.mxu0 %v79
    %89 = vmatprep.subr.bf16.mxu0 0
    %90 = vmatpush1.bf16.msra.mxu0 %v80
    %91 = vmatprep.subr.bf16.mxu0 0
    %92 = vmatpush1.bf16.msra.mxu0 0
    %93 = vmatprep.subr.bf16.mxu0 0
    %94 = vmatpush1.bf16.msra.mxu0 0
    %95 = vmatprep.subr.bf16.mxu0 0
    %96 = vmatpush1.bf16.msra.mxu0 0
    %97 = vmatprep.subr.bf16.mxu0 0
    %98 = vmatpush1.bf16.msra.mxu0 0
    %99 = vmatprep.subr.bf16.mxu0 0
    %100 = vmatpush1.bf16.msra.mxu0 0
    %101 = vmatprep.subr.bf16.mxu0 0
    %102 = vmatpush1.bf16.msra.mxu0 0
    %103 = vmatprep.subr.bf16.mxu0 0
    %104 = vmatpush1.bf16.msra.mxu0 0
    %105 = vmatprep.subr.bf16.mxu0 0
    %106 = vmatpush1.bf16.msra.mxu0 0
    %107 = vmatprep.subr.bf16.mxu0 0
    %108 = vmatpush1.bf16.msra.mxu0 0
    %109 = vmatprep.subr.bf16.mxu0 0
    %110 = vmatpush1.bf16.msra.mxu0 0
    %111 = vmatprep.subr.bf16.mxu0 0
    %112 = vmatpush1.bf16.msra.mxu0 0
    %113 = vmatprep.subr.bf16.mxu0 0
    %114 = vmatpush1.bf16.msra.mxu0 0
    %115 = vmatprep.subr.bf16.mxu0 0
    %116 = vmatpush1.bf16.msra.mxu0 0
    %117 = vmatprep.subr.bf16.mxu0 0
    %118 = vmatpush1.bf16.msra.mxu0 0
    %119 = vmatprep.mubr.bf16.mxu0 0
    %120 = vmatmul.mubr.bf16.gmra.mrb[0].mxu0 %v85
    %v121 = vpop.f32.mrb[0].mxu0
    %v122 = vadd.f32 0.0, %v121
    %v123 = vpop.f32.mrb[0].mxu0
    %v124 = vpop.f32.mrb[0].mxu0
    %v125 = vadd.f32 0.0, %v124
    %v126 = vpop.f32.mrb[0].mxu0
    %127 = vdwg.mxu0
    %v128 = vld [vmem:[%s2] sm:$0x1]
    %v130 = vlaneseq
    %v131 = vshrl.u32 %v130, 7
    %v132 = vsub.s32 0, %v131
    %v133 = vrot.slane %v128, %v132
    %v135 = vsub.f32 %v122, %v133
    %v136 = vsub.f32 %v125, %v133
    %v137 = vmul.f32 %v135, %v135
    %v138 = vmul.f32 %v136, %v136
    %v139 = vpack.c.bf16 %v138, %v137
    %v140 = vld [vmem:[#allocation7] sm:$0xf]
    %v141 = vld [vmem:[#allocation7 + $0x4] sm:$0xf]
    %v142 = vld [vmem:[#allocation7 + $0x8] sm:$0xf]
    %v143 = vld [vmem:[#allocation7 + $0xc] sm:$0xf]
    %v144 = vld [vmem:[#allocation7 + $0x10] sm:$0xf]
    %v145 = vld [vmem:[#allocation7 + $0x14] sm:$0xf]
    %v146 = vld [vmem:[#allocation7 + $0x18] sm:$0xf]
    %v147 = vld [vmem:[#allocation7 + $0x1c] sm:$0xf]
    %v148 = vld [vmem:[#allocation7 + $0x20] sm:$0xf]
    %v149 = vld [vmem:[#allocation7 + $0x24] sm:$0xf]
    %v150 = vld [vmem:[#allocation7 + $0x28] sm:$0xf]
    %v151 = vld [vmem:[#allocation7 + $0x2c] sm:$0xf]
    %v152 = vld [vmem:[#allocation7 + $0x30] sm:$0xf]
    %v153 = vld [vmem:[#allocation7 + $0x34] sm:$0xf]
    %v154 = vld [vmem:[#allocation7 + $0x38] sm:$0xf]
    %v155 = vld [vmem:[#allocation7 + $0x3c] sm:$0xf]
    %v172 = vunpack.c.l.b16 %v140
    %v173 = vunpack.c.l.b16 %v141
    %v174 = vunpack.c.l.b16 %v142
    %v175 = vunpack.c.l.b16 %v143
    %v176 = vunpack.c.l.b16 %v144
    %v177 = vunpack.c.l.b16 %v145
    %v178 = vunpack.c.l.b16 %v146
    %v179 = vunpack.c.l.b16 %v147
    %v180 = vunpack.c.l.b16 %v148
    %v181 = vunpack.c.l.b16 %v149
    %v182 = vunpack.c.l.b16 %v150
    %v183 = vunpack.c.l.b16 %v151
    %v184 = vunpack.c.l.b16 %v152
    %v185 = vunpack.c.l.b16 %v153
    %v186 = vunpack.c.l.b16 %v154
    %v187 = vunpack.c.l.b16 %v155
    %v188 = vpack.c.b16 %v173, %v172
    %v189 = vpack.c.b16 %v175, %v174
    %v190 = vpack.c.b16 %v177, %v176
    %v191 = vpack.c.b16 %v179, %v178
    %v192 = vpack.c.b16 %v181, %v180
    %v193 = vpack.c.b16 %v183, %v182
    %v194 = vpack.c.b16 %v185, %v184
    %v195 = vpack.c.b16 %v187, %v186
    %204 = vmatprep.subr.bf16.mxu0 0
    %205 = vmatpush1.bf16.msra.mxu0 %v188
    %206 = vmatprep.subr.bf16.mxu0 0
    %207 = vmatpush1.bf16.msra.mxu0 %v189
    %208 = vmatprep.subr.bf16.mxu0 0
    %209 = vmatpush1.bf16.msra.mxu0 %v190
    %210 = vmatprep.subr.bf16.mxu0 0
    %211 = vmatpush1.bf16.msra.mxu0 %v191
    %212 = vmatprep.subr.bf16.mxu0 0
    %213 = vmatpush1.bf16.msra.mxu0 %v192
    %214 = vmatprep.subr.bf16.mxu0 0
    %215 = vmatpush1.bf16.msra.mxu0 %v193
    %216 = vmatprep.subr.bf16.mxu0 0
    %217 = vmatpush1.bf16.msra.mxu0 %v194
    %218 = vmatprep.subr.bf16.mxu0 0
    %219 = vmatpush1.bf16.msra.mxu0 %v195
    %220 = vmatprep.subr.bf16.mxu0 0
    %221 = vmatpush1.bf16.msra.mxu0 0
    %222 = vmatprep.subr.bf16.mxu0 0
    %223 = vmatpush1.bf16.msra.mxu0 0
    %224 = vmatprep.subr.bf16.mxu0 0
    %225 = vmatpush1.bf16.msra.mxu0 0
    %226 = vmatprep.subr.bf16.mxu0 0
    %227 = vmatpush1.bf16.msra.mxu0 0
    %228 = vmatprep.subr.bf16.mxu0 0
    %229 = vmatpush1.bf16.msra.mxu0 0
    %230 = vmatprep.subr.bf16.mxu0 0
    %231 = vmatpush1.bf16.msra.mxu0 0
    %232 = vmatprep.subr.bf16.mxu0 0
    %233 = vmatpush1.bf16.msra.mxu0 0
    %234 = vmatprep.subr.bf16.mxu0 0
    %235 = vmatpush1.bf16.msra.mxu0 0
    %236 = vmatprep.mubr.bf16.mxu0 0
    %237 = vmatmul.mubr.bf16.gmra.mrb[0].mxu0 %v139
    %v238 = vpop.f32.mrb[0].mxu0
    %v239 = vadd.f32 0.0, %v238
    %v240 = vpop.f32.mrb[0].mxu0
    %v241 = vpop.f32.mrb[0].mxu0
    %v242 = vadd.f32 0.0, %v241
    %v243 = vpop.f32.mrb[0].mxu0
    %244 = vdwg.mxu0
    %v245 = vsub.f32 0.0, %v239
    %v246 = vsub.f32 0.0, %v242
    %v247 = vmul.f32 %v245, 1.442695
    %v248 = vpow.pop %v247
    %v249 = vmul.f32 %v246, 1.442695
    %v250 = vpow.pop %v249
    %v251 = vpack.c.bf16 %v250, %v248
    %v253 = vunpack.c.l.b16 %v251
    %v254 = vunpack.c.h.b16 %v251
    %v255 = vpack.c.b16 %v253, %v253
    %v256 = vpack.c.b16 %v254, %v254
    %259 = vst [vmem:[#allocation8] sm:$0xf] %v255
    %260 = vst [vmem:[#allocation8 + $0x4] sm:$0xf] %v256
    // Predicated region
    $region30: #{tpu_custom_call.1} parent=1 // pred_check
      _
    $region31: #{tpu_custom_call.1} parent=1 // pred_check_branch
      %262 = sbr.rel (0) target = $region33
    $region32: #{tpu_custom_call.1} parent=1 // pred_region
      %s264 = ssub.s32 128, 128
      %265 = vsyncadd [#allocation4], %s264
      %s266 = sshll.u32 [#allocation8], 4
      %s267 = int_to_ptr.vmem [resolvable:$true] %s266
      %272 = dma.vmem_to_hbm [thread:$0]  %s267, 128, %s4, [#allocation4], 64, 64, 4
    $region33: #{tpu_custom_call.1} parent=1 // pred_fallthru
      _
    // Predicated region
    $region34: #{tpu_custom_call.1} parent=1 // pred_check
      _
    $region35: #{tpu_custom_call.1} parent=1 // pred_check_branch
      %274 = sbr.rel (0) target = $region37
    $region36: #{tpu_custom_call.1} parent=1 // pred_region
      %275 = dma.done [#allocation4], 128
    $region37: #{tpu_custom_call.1} parent=1 // pred_fallthru
      _
    %276 = vsyncpa [#allocation3], 1
    %277 = vsyncpa [#allocation6], 1
    %278 = vsyncpa [#allocation4], 1

</llo_original>
